<compile_context>
chip_gen: v6e
topology: v6e:2x2x1
jax: 0.10.0
libtpu: 0.0.40
codegen_flags: <defaults>
</compile_context>

<pallas_src>
import functools

import jax
import jax.numpy as jnp
from jax.experimental import pallas as pl
from jax.experimental.pallas import tpu as pltpu


def _log_sigmoid(x):
    # numerically stable log(sigmoid(x)) = min(x, 0) - log1p(exp(-|x|))
    return jnp.minimum(x, 0.0) - jnp.log1p(jnp.exp(-jnp.abs(x)))


def _sgns_kernel(
    # scalar-prefetch refs (SMEM, int32)
    ci_ref, xi_ref, ni_ref,
    # inputs: full embedding tables, resident in VMEM across the whole grid
    center_tbl_ref, context_tbl_ref,
    # output: per-tile partial sum, dense (1, 8, 128) block
    partial_ref,
    # scratch (VMEM): gathered rows
    c_buf, x_buf, n_buf,
    *, tile_b, num_neg,
):
    TB = tile_b
    K = num_neg
    tile = pl.program_id(0)
    pair_base = tile * TB
    neg_base = tile * (TB * K)

    # ---- in-VMEM gather: dynamic row reads from the resident tables -------
    @pl.loop(0, TB)
    def _gather_pairs(r):
        c_buf[r] = center_tbl_ref[ci_ref[pair_base + r]]
        x_buf[r] = context_tbl_ref[xi_ref[pair_base + r]]

    # Negative indices were pre-reordered on the host to [k][b] per tile, so a
    # flat loop needs no div/mod and per-k slices of n_buf are contiguous.
    @pl.loop(0, TB * K)
    def _gather_negs(r):
        n_buf[r] = context_tbl_ref[ni_ref[neg_base + r]]

    # ---- positive term -----------------------------------------------------
    c = c_buf[...].astype(jnp.float32)                    # (TB, Dp)
    x = x_buf[...].astype(jnp.float32)                    # (TB, Dp)
    pos_scores = jnp.sum(c * x, axis=-1, keepdims=True)   # (TB, 1)
    total = jnp.sum(_log_sigmoid(pos_scores))

    # ---- negative term: per-k accumulation (no (TB, K, Dp) broadcast) ------
    for k in range(K):                                    # K is small & static
        nk = n_buf[pl.ds(k * TB, TB), :].astype(jnp.float32)      # (TB, Dp)
        neg_scores = jnp.sum(nk * c, axis=-1, keepdims=True)      # (TB, 1)
        total = total + jnp.sum(_log_sigmoid(-neg_scores))

    # Dense (8, 128) store; the wrapper reads element [0, 0] of each tile.
    # NOTE: normalization by the FULL batch (2B) happens outside the kernel.
    partial_ref[...] = jnp.full((1, 8, 128), total, dtype=jnp.float32)


def sgns_forward(center_table, context_table,
                 center_idx, context_idx, negative_idx, *, tile_b=None):
    """SGNS forward loss with VMEM-resident tables and in-kernel gathers."""
    B = int(center_idx.shape[0])
    K = int(negative_idx.shape[1])
    V, D = center_table.shape

    if tile_b is None:
        tile_b = 1
        for t in (512, 256, 128, 64, 32, 16, 8, 4, 2, 1):
            if B % t == 0:
                tile_b = t
                break
    assert B % tile_b == 0, "batch must be a multiple of the batch tile"
    num_tiles = B // tile_b

    # Pad the embedding dim to full 128-lane rows (zero padding is
    # dot-product neutral), keeping D as the last (lane) axis.
    D_pad = max(128, ((D + 127) // 128) * 128)
    if D_pad != D:
        pad = ((0, 0), (0, D_pad - D))
        center_table = jnp.pad(center_table, pad)
        context_table = jnp.pad(context_table, pad)

    tbl_dtype = center_table.dtype
    itemsize = jnp.dtype(tbl_dtype).itemsize

    # ---- VMEM budget (sized for v7x's 64 MiB/TC; v5e/v6e have >= 128 MiB) --
    tables_bytes = 2 * V * D_pad * itemsize
    scratch_bytes = (2 * tile_b + tile_b * K) * D_pad * itemsize
    out_bytes = 2 * num_tiles * 8 * 128 * 4
    needed = 2 * tables_bytes + scratch_bytes + out_bytes  # 2x: table buffering
    vmem_budget = 56 * 1024 * 1024
    if needed > vmem_budget:
        # TODO(synk): add an HBM-gather fallback (pl.ANY tables + bulk DMAs with
        # shared counted semaphores) for vocab tables larger than VMEM.
        raise NotImplementedError(
            "embedding tables too large for the VMEM-resident fast path")
    vmem_limit = int(min(vmem_budget,
                         max(32 * 1024 * 1024, needed + 4 * 1024 * 1024)))

    # ---- index prep (SMEM scalar prefetch) ---------------------------------
    ci = center_idx.reshape(B).astype(jnp.int32)
    xi = context_idx.reshape(B).astype(jnp.int32)
    # Per tile, reorder negatives to [k][b] so the kernel's flat gather loop
    # needs no div/mod and n_buf[k*TB:(k+1)*TB] is negative slot k for all b.
    ni = (negative_idx.astype(jnp.int32)
          .reshape(num_tiles, tile_b, K)
          .transpose(0, 2, 1)
          .reshape(B * K))

    kernel = functools.partial(_sgns_kernel, tile_b=tile_b, num_neg=K)

    grid_spec = pltpu.PrefetchScalarGridSpec(
        num_scalar_prefetch=3,
        grid=(num_tiles,),
        in_specs=[
            # Full tables, constant block index => DMA'd once, kept resident.
            pl.BlockSpec((V, D_pad), lambda i, *_: (0, 0)),
            pl.BlockSpec((V, D_pad), lambda i, *_: (0, 0)),
        ],
        out_specs=pl.BlockSpec((1, 8, 128), lambda i, *_: (i, 0, 0)),
        scratch_shapes=[
            pltpu.VMEM((tile_b, D_pad), tbl_dtype),          # gathered centers
            pltpu.VMEM((tile_b, D_pad), tbl_dtype),          # gathered contexts
            pltpu.VMEM((tile_b * K, D_pad), tbl_dtype),      # gathered negatives
        ],
    )

    partials = pl.pallas_call(
        kernel,
        out_shape=jax.ShapeDtypeStruct((num_tiles, 8, 128), jnp.float32),
        grid_spec=grid_spec,
        compiler_params=pltpu.CompilerParams(
            dimension_semantics=("parallel",),   # tiles shard across TCs (v7x)
            vmem_limit_bytes=vmem_limit,
        ),
    )(ci, xi, ni, center_table, context_table)

    # Cross-tile reduction + normalization by the FULL batch:
    # len(positive_scores) + len(negative_scores) == B + B in the PyTorch ref.
    total = jnp.sum(partials[:, 0, 0])
    return -total / jnp.float32(2 * B)


if __name__ == "__main__":
    # Small, deterministic setup (mirrors SGNSModel.__init__ / init_weights).
    vocab_size = 64
    embedding_dim = 32
    B = 16   # batch of (center, context) pairs
    K = 4    # negative samples per pair
    TB = 8   # batch tile -> grid of 2 tiles (even, balanced across TCs)

    initrange = 0.5 / embedding_dim
    key = jax.random.PRNGKey(0)
    k_center, k_context, k_ci, k_xi, k_ni = jax.random.split(key, 5)

    # f32 tables (matches the PyTorch module's numerics exactly).
    center_table = jax.random.uniform(
        k_center, (vocab_size, embedding_dim),
        minval=-initrange, maxval=initrange, dtype=jnp.float32)
    context_table = jax.random.uniform(
        k_context, (vocab_size, embedding_dim),
        minval=-initrange, maxval=initrange, dtype=jnp.float32)

    center_idx = jax.random.randint(k_ci, (B,), 0, vocab_size, dtype=jnp.int32)
    context_idx = jax.random.randint(k_xi, (B,), 0, vocab_size, dtype=jnp.int32)
    negative_idx = jax.random.randint(k_ni, (B, K), 0, vocab_size, dtype=jnp.int32)

    loss = sgns_forward(center_table, context_table,
                        center_idx, context_idx, negative_idx, tile_b=TB)
    loss = jax.block_until_ready(loss)

    # Pure-JAX reference with identical semantics.
    ce = center_table[center_idx]
    xe = context_table[context_idx]
    ne = context_table[negative_idx]
    pos = jnp.sum(ce * xe, axis=1)
    neg = jnp.einsum('bkd,bd->bk', ne, ce)
    ref = -(jnp.sum(jax.nn.log_sigmoid(pos)) +
            jnp.sum(jax.nn.log_sigmoid(-neg))) / (B + B)
    assert jnp.allclose(loss, ref, atol=1e-4, rtol=1e-5), (loss, ref)

    print("KERNEL_OK")
</pallas_src>

<mosaic_0001>
module attributes {stable_mosaic.version = 11 : i64} {
  func.func @_sgns_kernel(%arg0: i32, %arg1: memref<16xi32, #tpu.memory_space<smem>>, %arg2: memref<16xi32, #tpu.memory_space<smem>>, %arg3: memref<64xi32, #tpu.memory_space<smem>>, %arg4: memref<64x128xf32, #tpu.memory_space<vmem>>, %arg5: memref<64x128xf32, #tpu.memory_space<vmem>>, %arg6: memref<1x8x128xf32, #tpu.memory_space<vmem>>, %arg7: memref<8x128xf32, #tpu.memory_space<vmem>>, %arg8: memref<8x128xf32, #tpu.memory_space<vmem>>, %arg9: memref<32x128xf32, #tpu.memory_space<vmem>>) attributes {dimension_semantics = [#tpu.dimension_semantics<parallel>], iteration_bounds = array<i64: 2>, scalar_prefetch = 3 : i64, scratch_operands = 3 : i64, tpu.core_type = #tpu.core_type<tc>, window_params = [{pipeline_mode = #tpu.pipeline_mode<synchronous>, transform_indices = @transform_0, window_bounds = array<i64: 64, 128>}, {pipeline_mode = #tpu.pipeline_mode<synchronous>, transform_indices = @transform_1, window_bounds = array<i64: 64, 128>}, {transform_indices = @transform_2, window_bounds = array<i64: 1, 8, 128>}]} {
    %c8_i32 = arith.constant 8 : i32
    %0 = arith.muli %arg0, %c8_i32 : i32
    %c32_i32 = arith.constant 32 : i32
    %1 = arith.muli %arg0, %c32_i32 : i32
    %c0_i32 = arith.constant 0 : i32
    %c8_i32_0 = arith.constant 8 : i32
    %2 = arith.addi %c0_i32, %c8_i32_0 : i32
    %c1_i32 = arith.constant 1 : i32
    scf.for %arg10 = %c0_i32 to %2 step %c1_i32  : i32 {
      %c1_i32_40 = arith.constant 1 : i32
      %99 = arith.muli %arg10, %c1_i32_40 : i32
      %c0_i32_41 = arith.constant 0 : i32
      %100 = arith.addi %c0_i32_41, %99 : i32
      %101 = arith.addi %0, %100 : i32
      %102 = arith.index_cast %101 : i32 to index
      %103 = memref.load %arg1[%102] : memref<16xi32, #tpu.memory_space<smem>>
      %104 = arith.index_cast %103 : i32 to index
      %c0_42 = arith.constant 0 : index
      %105 = vector.load %arg4[%104, %c0_42] : memref<64x128xf32, #tpu.memory_space<vmem>>, vector<1x128xf32>
      %106 = vector.shape_cast %105 : vector<1x128xf32> to vector<128xf32>
      %107 = arith.index_cast %100 : i32 to index
      %c0_43 = arith.constant 0 : index
      %108 = vector.load %arg7[%107, %c0_43] : memref<8x128xf32, #tpu.memory_space<vmem>>, vector<1x128xf32>
      %109 = vector.shape_cast %108 : vector<1x128xf32> to vector<128xf32>
      %110 = vector.shape_cast %106 : vector<128xf32> to vector<1x128xf32>
      tpu.vector_store %arg7[%107, %c0_43], %110 {strides = array<i32>} : memref<8x128xf32, #tpu.memory_space<vmem>>, vector<1x128xf32>,
      %111 = arith.addi %0, %100 : i32
      %112 = arith.index_cast %111 : i32 to index
      %113 = memref.load %arg2[%112] : memref<16xi32, #tpu.memory_space<smem>>
      %114 = arith.index_cast %113 : i32 to index
      %c0_44 = arith.constant 0 : index
      %115 = vector.load %arg5[%114, %c0_44] : memref<64x128xf32, #tpu.memory_space<vmem>>, vector<1x128xf32>
      %116 = vector.shape_cast %115 : vector<1x128xf32> to vector<128xf32>
      %117 = arith.index_cast %100 : i32 to index
      %c0_45 = arith.constant 0 : index
      %118 = vector.load %arg8[%117, %c0_45] : memref<8x128xf32, #tpu.memory_space<vmem>>, vector<1x128xf32>
      %119 = vector.shape_cast %118 : vector<1x128xf32> to vector<128xf32>
      %120 = vector.shape_cast %116 : vector<128xf32> to vector<1x128xf32>
      tpu.vector_store %arg8[%117, %c0_45], %120 {strides = array<i32>} : memref<8x128xf32, #tpu.memory_space<vmem>>, vector<1x128xf32>,
    }
    %c8_i32_1 = arith.constant 8 : i32
    %c0_i32_2 = arith.constant 0 : i32
    %c32_i32_3 = arith.constant 32 : i32
    %3 = arith.addi %c0_i32_2, %c32_i32_3 : i32
    %c1_i32_4 = arith.constant 1 : i32
    scf.for %arg10 = %c0_i32_2 to %3 step %c1_i32_4  : i32 {
      %c1_i32_40 = arith.constant 1 : i32
      %99 = arith.muli %arg10, %c1_i32_40 : i32
      %c0_i32_41 = arith.constant 0 : i32
      %100 = arith.addi %c0_i32_41, %99 : i32
      %101 = arith.addi %1, %100 : i32
      %102 = arith.index_cast %101 : i32 to index
      %103 = memref.load %arg3[%102] : memref<64xi32, #tpu.memory_space<smem>>
      %104 = arith.index_cast %103 : i32 to index
      %c0_42 = arith.constant 0 : index
      %105 = vector.load %arg5[%104, %c0_42] : memref<64x128xf32, #tpu.memory_space<vmem>>, vector<1x128xf32>
      %106 = vector.shape_cast %105 : vector<1x128xf32> to vector<128xf32>
      %107 = arith.index_cast %100 : i32 to index
      %c0_43 = arith.constant 0 : index
      %108 = vector.load %arg9[%107, %c0_43] : memref<32x128xf32, #tpu.memory_space<vmem>>, vector<1x128xf32>
      %109 = vector.shape_cast %108 : vector<1x128xf32> to vector<128xf32>
      %110 = vector.shape_cast %106 : vector<128xf32> to vector<1x128xf32>
      tpu.vector_store %arg9[%107, %c0_43], %110 {strides = array<i32>} : memref<32x128xf32, #tpu.memory_space<vmem>>, vector<1x128xf32>,
    }
    %c32_i32_5 = arith.constant 32 : i32
    %c0 = arith.constant 0 : index
    %c0_6 = arith.constant 0 : index
    %4 = vector.load %arg7[%c0, %c0_6] : memref<8x128xf32, #tpu.memory_space<vmem>>, vector<8x128xf32>
    %c0_7 = arith.constant 0 : index
    %c0_8 = arith.constant 0 : index
    %5 = vector.load %arg8[%c0_7, %c0_8] : memref<8x128xf32, #tpu.memory_space<vmem>>, vector<8x128xf32>
    %6 = arith.mulf %4, %5 : vector<8x128xf32>
    %cst = arith.constant dense<0.000000e+00> : vector<8xf32>
    %7 = vector.multi_reduction <add>, %6, %cst [1] : vector<8x128xf32> to vector<8xf32>
    %8 = vector.shape_cast %7 : vector<8xf32> to vector<8x1xf32>
    %cst_9 = arith.constant 0.000000e+00 : f32
    %9 = vector.broadcast %cst_9 : f32 to vector<8x1xf32>
    %10 = arith.minimumf %8, %9 : vector<8x1xf32>
    %11 = math.absf %8 : vector<8x1xf32>
    %cst_10 = arith.constant 0.000000e+00 : f32
    %12 = vector.broadcast %cst_10 : f32 to vector<8x1xf32>
    %13 = arith.subf %12, %11 : vector<8x1xf32>
    %14 = math.exp %13 : vector<8x1xf32>
    %15 = math.log1p %14 : vector<8x1xf32>
    %16 = arith.subf %10, %15 : vector<8x1xf32>
    %17 = vector.shape_cast %16 : vector<8x1xf32> to vector<1x8x1xf32>
    %cst_11 = arith.constant dense<0.000000e+00> : vector<1xf32>
    %18 = vector.multi_reduction <add>, %17, %cst_11 [1, 2] : vector<1x8x1xf32> to vector<1xf32>
    %19 = vector.shape_cast %18 : vector<1xf32> to vector<1x1x1xf32>
    %20 = vector.extract %19[0, 0, 0] : f32 from vector<1x1x1xf32>
    %c0_12 = arith.constant 0 : index
    %c0_13 = arith.constant 0 : index
    %21 = vector.load %arg9[%c0_12, %c0_13] : memref<32x128xf32, #tpu.memory_space<vmem>>, vector<8x128xf32>
    %22 = arith.mulf %21, %4 : vector<8x128xf32>
    %cst_14 = arith.constant dense<0.000000e+00> : vector<8xf32>
    %23 = vector.multi_reduction <add>, %22, %cst_14 [1] : vector<8x128xf32> to vector<8xf32>
    %24 = vector.shape_cast %23 : vector<8xf32> to vector<8x1xf32>
    %cst_15 = arith.constant 0.000000e+00 : f32
    %25 = vector.broadcast %cst_15 : f32 to vector<8x1xf32>
    %26 = arith.subf %25, %24 : vector<8x1xf32>
    %cst_16 = arith.constant 0.000000e+00 : f32
    %27 = vector.broadcast %cst_16 : f32 to vector<8x1xf32>
    %28 = arith.minimumf %26, %27 : vector<8x1xf32>
    %29 = math.absf %26 : vector<8x1xf32>
    %cst_17 = arith.constant 0.000000e+00 : f32
    %30 = vector.broadcast %cst_17 : f32 to vector<8x1xf32>
    %31 = arith.subf %30, %29 : vector<8x1xf32>
    %32 = math.exp %31 : vector<8x1xf32>
    %33 = math.log1p %32 : vector<8x1xf32>
    %34 = arith.subf %28, %33 : vector<8x1xf32>
    %35 = vector.shape_cast %34 : vector<8x1xf32> to vector<1x8x1xf32>
    %cst_18 = arith.constant dense<0.000000e+00> : vector<1xf32>
    %36 = vector.multi_reduction <add>, %35, %cst_18 [1, 2] : vector<1x8x1xf32> to vector<1xf32>
    %37 = vector.shape_cast %36 : vector<1xf32> to vector<1x1x1xf32>
    %38 = vector.extract %37[0, 0, 0] : f32 from vector<1x1x1xf32>
    %39 = arith.addf %20, %38 : f32
    %c8 = arith.constant 8 : index
    %c0_19 = arith.constant 0 : index
    %40 = vector.load %arg9[%c8, %c0_19] : memref<32x128xf32, #tpu.memory_space<vmem>>, vector<8x128xf32>
    %41 = arith.mulf %40, %4 : vector<8x128xf32>
    %cst_20 = arith.constant dense<0.000000e+00> : vector<8xf32>
    %42 = vector.multi_reduction <add>, %41, %cst_20 [1] : vector<8x128xf32> to vector<8xf32>
    %43 = vector.shape_cast %42 : vector<8xf32> to vector<8x1xf32>
    %cst_21 = arith.constant 0.000000e+00 : f32
    %44 = vector.broadcast %cst_21 : f32 to vector<8x1xf32>
    %45 = arith.subf %44, %43 : vector<8x1xf32>
    %cst_22 = arith.constant 0.000000e+00 : f32
    %46 = vector.broadcast %cst_22 : f32 to vector<8x1xf32>
    %47 = arith.minimumf %45, %46 : vector<8x1xf32>
    %48 = math.absf %45 : vector<8x1xf32>
    %cst_23 = arith.constant 0.000000e+00 : f32
    %49 = vector.broadcast %cst_23 : f32 to vector<8x1xf32>
    %50 = arith.subf %49, %48 : vector<8x1xf32>
    %51 = math.exp %50 : vector<8x1xf32>
    %52 = math.log1p %51 : vector<8x1xf32>
    %53 = arith.subf %47, %52 : vector<8x1xf32>
    %54 = vector.shape_cast %53 : vector<8x1xf32> to vector<1x8x1xf32>
    %cst_24 = arith.constant dense<0.000000e+00> : vector<1xf32>
    %55 = vector.multi_reduction <add>, %54, %cst_24 [1, 2] : vector<1x8x1xf32> to vector<1xf32>
    %56 = vector.shape_cast %55 : vector<1xf32> to vector<1x1x1xf32>
    %57 = vector.extract %56[0, 0, 0] : f32 from vector<1x1x1xf32>
    %58 = arith.addf %39, %57 : f32
    %c16 = arith.constant 16 : index
    %c0_25 = arith.constant 0 : index
    %59 = vector.load %arg9[%c16, %c0_25] : memref<32x128xf32, #tpu.memory_space<vmem>>, vector<8x128xf32>
    %60 = arith.mulf %59, %4 : vector<8x128xf32>
    %cst_26 = arith.constant dense<0.000000e+00> : vector<8xf32>
    %61 = vector.multi_reduction <add>, %60, %cst_26 [1] : vector<8x128xf32> to vector<8xf32>
    %62 = vector.shape_cast %61 : vector<8xf32> to vector<8x1xf32>
    %cst_27 = arith.constant 0.000000e+00 : f32
    %63 = vector.broadcast %cst_27 : f32 to vector<8x1xf32>
    %64 = arith.subf %63, %62 : vector<8x1xf32>
    %cst_28 = arith.constant 0.000000e+00 : f32
    %65 = vector.broadcast %cst_28 : f32 to vector<8x1xf32>
    %66 = arith.minimumf %64, %65 : vector<8x1xf32>
    %67 = math.absf %64 : vector<8x1xf32>
    %cst_29 = arith.constant 0.000000e+00 : f32
    %68 = vector.broadcast %cst_29 : f32 to vector<8x1xf32>
    %69 = arith.subf %68, %67 : vector<8x1xf32>
    %70 = math.exp %69 : vector<8x1xf32>
    %71 = math.log1p %70 : vector<8x1xf32>
    %72 = arith.subf %66, %71 : vector<8x1xf32>
    %73 = vector.shape_cast %72 : vector<8x1xf32> to vector<1x8x1xf32>
    %cst_30 = arith.constant dense<0.000000e+00> : vector<1xf32>
    %74 = vector.multi_reduction <add>, %73, %cst_30 [1, 2] : vector<1x8x1xf32> to vector<1xf32>
    %75 = vector.shape_cast %74 : vector<1xf32> to vector<1x1x1xf32>
    %76 = vector.extract %75[0, 0, 0] : f32 from vector<1x1x1xf32>
    %77 = arith.addf %58, %76 : f32
    %c24 = arith.constant 24 : index
    %c0_31 = arith.constant 0 : index
    %78 = vector.load %arg9[%c24, %c0_31] : memref<32x128xf32, #tpu.memory_space<vmem>>, vector<8x128xf32>
    %79 = arith.mulf %78, %4 : vector<8x128xf32>
    %cst_32 = arith.constant dense<0.000000e+00> : vector<8xf32>
    %80 = vector.multi_reduction <add>, %79, %cst_32 [1] : vector<8x128xf32> to vector<8xf32>
    %81 = vector.shape_cast %80 : vector<8xf32> to vector<8x1xf32>
    %cst_33 = arith.constant 0.000000e+00 : f32
    %82 = vector.broadcast %cst_33 : f32 to vector<8x1xf32>
    %83 = arith.subf %82, %81 : vector<8x1xf32>
    %cst_34 = arith.constant 0.000000e+00 : f32
    %84 = vector.broadcast %cst_34 : f32 to vector<8x1xf32>
    %85 = arith.minimumf %83, %84 : vector<8x1xf32>
    %86 = math.absf %83 : vector<8x1xf32>
    %cst_35 = arith.constant 0.000000e+00 : f32
    %87 = vector.broadcast %cst_35 : f32 to vector<8x1xf32>
    %88 = arith.subf %87, %86 : vector<8x1xf32>
    %89 = math.exp %88 : vector<8x1xf32>
    %90 = math.log1p %89 : vector<8x1xf32>
    %91 = arith.subf %85, %90 : vector<8x1xf32>
    %92 = vector.shape_cast %91 : vector<8x1xf32> to vector<1x8x1xf32>
    %cst_36 = arith.constant dense<0.000000e+00> : vector<1xf32>
    %93 = vector.multi_reduction <add>, %92, %cst_36 [1, 2] : vector<1x8x1xf32> to vector<1xf32>
    %94 = vector.shape_cast %93 : vector<1xf32> to vector<1x1x1xf32>
    %95 = vector.extract %94[0, 0, 0] : f32 from vector<1x1x1xf32>
    %96 = arith.addf %77, %95 : f32
    %97 = vector.broadcast %96 : f32 to vector<1x8x128xf32>
    %c0_37 = arith.constant 0 : index
    %c0_38 = arith.constant 0 : index
    %c0_39 = arith.constant 0 : index
    %98 = vector.load %arg6[%c0_37, %c0_38, %c0_39] : memref<1x8x128xf32, #tpu.memory_space<vmem>>, vector<1x8x128xf32>
    tpu.vector_store %arg6[%c0_37, %c0_38, %c0_39], %97 {strides = array<i32>} : memref<1x8x128xf32, #tpu.memory_space<vmem>>, vector<1x8x128xf32>,
    return
  }
  func.func @transform_0(%arg0: i32, %arg1: memref<16xi32, #tpu.memory_space<smem>>, %arg2: memref<16xi32, #tpu.memory_space<smem>>, %arg3: memref<64xi32, #tpu.memory_space<smem>>) -> (i32, i32) {
    %c0_i32 = arith.constant 0 : i32
    %c0_i32_0 = arith.constant 0 : i32
    %c0_i32_1 = arith.constant 0 : i32
    return %c0_i32, %c0_i32_0 : i32, i32
  }
  func.func @transform_1(%arg0: i32, %arg1: memref<16xi32, #tpu.memory_space<smem>>, %arg2: memref<16xi32, #tpu.memory_space<smem>>, %arg3: memref<64xi32, #tpu.memory_space<smem>>) -> (i32, i32) {
    %c0_i32 = arith.constant 0 : i32
    %c0_i32_0 = arith.constant 0 : i32
    %c0_i32_1 = arith.constant 0 : i32
    return %c0_i32, %c0_i32_0 : i32, i32
  }
  func.func @transform_2(%arg0: i32, %arg1: memref<16xi32, #tpu.memory_space<smem>>, %arg2: memref<16xi32, #tpu.memory_space<smem>>, %arg3: memref<64xi32, #tpu.memory_space<smem>>) -> (i32, i32, i32) {
    %c0_i32 = arith.constant 0 : i32
    %c0_i32_0 = arith.constant 0 : i32
    %c0_i32_1 = arith.constant 0 : i32
    return %arg0, %c0_i32, %c0_i32_0 : i32, i32, i32
  }
}

</mosaic_0001>

<llo_original>
// kernel: tpu_custom_call.1
$region0: #{tpu_custom_call.1}
  #allocation0 [shape = 'u32[]', space=smem, size = 0x4, offset = 0x4, fixed_abs, tag = 'smem constant byte address 0x4 - core index']
  #allocation1 [shape = 'u32[144,128]{1,0:T(1,128)}', space=vmem, size = 0x12000, scoped, tag = 'internal scratch']
  #allocation2 [shape = 'f32[8,128]{1,0:T(8,128)}', space=vmem, size = 0x1000, scoped, tag = 'scratch operand']
  #allocation3 [shape = 'f32[8,128]{1,0:T(8,128)}', space=vmem, size = 0x1000, scoped, tag = 'scratch operand']
  #allocation4 [shape = 'f32[32,128]{1,0:T(8,128)}', space=vmem, size = 0x4000, scoped, tag = 'scratch operand']
  #allocation5 [shape = 's32[1]{0}', space=sflag, size = 0x4, scoped, tag = 'scoped memory for tpu_custom_call.1']
  #allocation6 [shape = 'u8[512]{0}', space=smem, size = 0x200, scoped, tag = 'prefetched SMEM operand 0']
  #allocation7 [shape = 'u8[512]{0}', space=smem, size = 0x200, scoped, tag = 'prefetched SMEM operand 1']
  #allocation8 [shape = 'u8[512]{0}', space=smem, size = 0x200, scoped, tag = 'prefetched SMEM operand 2']
  %s0 = inlined_call_operand.hbm [shape: s32[16], index: 0, kind: input, shape index: {}]
  %s1 = inlined_call_operand.vmem [shape: s32[16], index: 1, kind: input, shape index: {}]
  %s2 = inlined_call_operand.vmem [shape: s32[64], index: 2, kind: input, shape index: {}]
  %s3 = inlined_call_operand.hbm [shape: f32[64,128], index: 3, kind: input, shape index: {}]
  %s4 = inlined_call_operand.hbm [shape: f32[64,128], index: 4, kind: input, shape index: {}]
  %s5 = inlined_call_operand.hbm [shape: f32[2,8,128], index: 5, kind: output, shape index: {}]
  %s6 = sld [smem:[#allocation0]]
  $region63: #{tpu_custom_call.1} parent=0
    _
  %s8 = ssub.s32 1, %s6
  %s9 = scalar_select 0, %s8, %s6
  %11 = dma.hbm_to_smem %s0, 16, [#allocation6], [#allocation5]
  %s12 = sshll.u32 %s1, 4
  %s13 = int_to_ptr.vmem [resolvable:$true] %s12
  %15 = dma.vmem_to_smem %s13, 16, [#allocation7], [#allocation5]
  %s16 = sshll.u32 %s2, 4
  %s17 = int_to_ptr.vmem [resolvable:$true] %s16
  %19 = dma.vmem_to_smem %s17, 16, [#allocation8], [#allocation5]
  %20 = dma.done [#allocation5], 48
  %21 = sfence
  $region1: #{tpu_custom_call.1} parent=0
    #allocation9 [shape = 'u8[32768]{0}', space=vmem, size = 0x8000, scoped, tag = 'input window, operand 3, single buffered']
    #allocation10 [shape = 's32[2]{0}', space=sflag, size = 0x8, scoped, tag = 'scoped memory for tpu_custom_call.1']
    #allocation11 [shape = 's32[2]{0}', space=sflag, size = 0x8, scoped, tag = 'scoped memory for tpu_custom_call.1']
    #allocation12 [shape = 'u8[32768]{0}', space=vmem, size = 0x8000, scoped, tag = 'input window, operand 4, single buffered']
    #allocation13 [shape = 's32[1]{0}', space=sflag, size = 0x4, scoped, tag = 'scoped memory for tpu_custom_call.1']
    #allocation14 [shape = 'u8[8192]{0}', space=vmem, size = 0x2000, scoped, tag = 'output window, operand 0']
    %22 = vsyncpa [#allocation10], 0
    %23 = vsyncpa [#allocation13], 0
    %24 = vsyncpa [#allocation11], 0
    %s25 = scalar_lea.sflag [#allocation11], 1
    %26 = vsyncpa %s25, 0
    loop: start=0, step=1, limit=4
    $region2: #{tpu_custom_call.1} parent=1 // loop_pre_header
      _
    $region3: #{tpu_custom_call.1} parent=1 // loop_header
      %s28 = sphi 0, %s32
      %p29 = scmp.ge.s32.totalorder %s28, 4
      %s36 = sphi 0, %s36
      %s38 = sphi 0, %s36
      %s39 = sphi 0, %s38
      %s53 = sphi 0, %s39
      %s57 = sphi 0, %s57
      %s59 = sphi 0, %s57
      %s60 = sphi 0, %s59
      %s74 = sphi 0, %s60
      %s80 = sphi 0, %s82
      %s83 = sphi 0, %s80
      %s84 = sphi 0, %s83
      %s100 = sphi 0, %s84
    $region4: #{tpu_custom_call.1} parent=1 // loop_header_branch
      %31 = sbr.rel (%p29) target = $region8
    $region5: #{tpu_custom_call.1} parent=1 // loop_body
      %s33 = ssub.s32 %s28, 1
      %s34 = ssub.s32 %s28, 2
      %s35 = sadd.s32 %s28, 1
      %s37 = sadd.s32 %s36, 1
      %p40 = scmp.eq.s32.totalorder %s28, 1
      %p41 = scmp.ne.s32.totalorder %s36, %s38
      %p42 = scmp.eq.s32.totalorder %s28, 0
      %p43 = por %p41, %p42
      %p44 = scmp.ne.s32.totalorder %s36, %s38
      %p45 = scmp.eq.s32.totalorder %s33, 1
      %p46 = por %p44, %p45
      %p47 = scmp.ne.s32.totalorder %s38, %s39
      %p48 = scmp.eq.s32.totalorder %s33, 0
      %p49 = por %p47, %p48
      %p50 = scmp.ne.s32.totalorder %s38, %s39
      %p51 = scmp.eq.s32.totalorder %s34, 1
      %p52 = por %p50, %p51
      %p54 = scmp.ne.s32.totalorder %s39, %s53
      %p55 = scmp.eq.s32.totalorder %s34, 0
      %p56 = por %p54, %p55
      %s58 = sadd.s32 %s57, 1
      %p61 = scmp.eq.s32.totalorder %s28, 1
      %p62 = scmp.ne.s32.totalorder %s57, %s59
      %p63 = scmp.eq.s32.totalorder %s28, 0
      %p64 = por %p62, %p63
      %p65 = scmp.ne.s32.totalorder %s57, %s59
      %p66 = scmp.eq.s32.totalorder %s33, 1
      %p67 = por %p65, %p66
      %p68 = scmp.ne.s32.totalorder %s59, %s60
      %p69 = scmp.eq.s32.totalorder %s33, 0
      %p70 = por %p68, %p69
      %p71 = scmp.ne.s32.totalorder %s59, %s60
      %p72 = scmp.eq.s32.totalorder %s34, 1
      %p73 = por %p71, %p72
      %p75 = scmp.ne.s32.totalorder %s60, %s74
      %p76 = scmp.eq.s32.totalorder %s34, 0
      %p77 = por %p75, %p76
      %s78 = ssub.s32 %s28, %s35
      %p79 = scmp.eq.s32.totalorder %s78, 0
      %s81 = sadd.s32 %s80, 1
      %s82 = scalar_select %p79, %s80, %s81
      %p85 = pneg %p79
      %p86 = scmp.eq.s32.totalorder %s28, 1
      %p87 = por %p85, %p86
      %p88 = scmp.ne.s32.totalorder %s80, %s83
      %p89 = scmp.eq.s32.totalorder %s28, 0
      %p90 = por %p88, %p89
      %p91 = scmp.ne.s32.totalorder %s80, %s83
      %p92 = scmp.eq.s32.totalorder %s33, 1
      %p93 = por %p91, %p92
      %p94 = scmp.ne.s32.totalorder %s83, %s84
      %p95 = scmp.eq.s32.totalorder %s33, 0
      %p96 = por %p94, %p95
      %p97 = scmp.ne.s32.totalorder %s83, %s84
      %p98 = scmp.eq.s32.totalorder %s34, 1
      %p99 = por %p97, %p98
      %p101 = scmp.ne.s32.totalorder %s84, %s100
      %p102 = scmp.eq.s32.totalorder %s34, 0
      %p103 = por %p101, %p102
      %p104 = scmp.le.s32.totalorder 1, %s28
      %p105 = scmp.lt.s32.totalorder %s28, 3
      %p106 = pnand %p104, %p105
      %p107 = pneg %p106
      // Predicated region
      $region9: #{tpu_custom_call.1} parent=5 // pred_check
        _
      $region10: #{tpu_custom_call.1} parent=5 // pred_check_branch
        %109 = sbr.rel (%p106) target = $region12
      $region11: #{tpu_custom_call.1} parent=5 // pred_region
        %s110 = ssub.s32 %s28, 1
        // Predicated region
        $region13: #{tpu_custom_call.1} parent=11 // pred_check
          %p111 = pneg %p49
        $region14: #{tpu_custom_call.1} parent=11 // pred_check_branch
          %113 = sbr.rel (%p111) target = $region16
        $region15: #{tpu_custom_call.1} parent=11 // pred_region
          %s115 = ssub.s32 1024, 1024
          %116 = vsyncadd [#allocation10], %s115
          %s117 = sshll.u32 [#allocation9], 4
          %s118 = int_to_ptr.vmem [resolvable:$true] %s117
          %123 = dma.hbm_to_vmem [thread:$0]  %s3, 1024, %s118, [#allocation10], 128, 128, 8
        $region16: #{tpu_custom_call.1} parent=11 // pred_fallthru
          _
        // Predicated region
        $region17: #{tpu_custom_call.1} parent=11 // pred_check
          %p124 = pneg %p70
        $region18: #{tpu_custom_call.1} parent=11 // pred_check_branch
          %126 = sbr.rel (%p124) target = $region20
        $region19: #{tpu_custom_call.1} parent=11 // pred_region
          %s128 = ssub.s32 1024, 1024
          %129 = vsyncadd [#allocation13], %s128
          %s130 = sshll.u32 [#allocation12], 4
          %s131 = int_to_ptr.vmem [resolvable:$true] %s130
          %136 = dma.hbm_to_vmem [thread:$0]  %s4, 1024, %s131, [#allocation13], 128, 128, 8
        $region20: #{tpu_custom_call.1} parent=11 // pred_fallthru
          _
      $region12: #{tpu_custom_call.1} parent=5 // pred_fallthru
        _
      %p137 = scmp.lt.s32.totalorder %s28, 2
      // Predicated region
      $region21: #{tpu_custom_call.1} parent=5 // pred_check
        %p138 = pneg %p137
      $region22: #{tpu_custom_call.1} parent=5 // pred_check_branch
        %140 = sbr.rel (%p138) target = $region24
      $region23: #{tpu_custom_call.1} parent=5 // pred_region
        _
      $region24: #{tpu_custom_call.1} parent=5 // pred_fallthru
        _
      %p141 = scmp.le.s32.totalorder 1, %s28
      %p142 = scmp.lt.s32.totalorder %s28, 3
      %p143 = pnand %p141, %p142
      %p144 = pneg %p143
      // Predicated region
      $region25: #{tpu_custom_call.1} parent=5 // pred_check
        _
      $region26: #{tpu_custom_call.1} parent=5 // pred_check_branch
        %146 = sbr.rel (%p143) target = $region28
      $region27: #{tpu_custom_call.1} parent=5 // pred_region
        %s147 = ssub.s32 %s28, 1
        // Predicated region
        $region29: #{tpu_custom_call.1} parent=27 // pred_check
          %p148 = pneg %p49
        $region30: #{tpu_custom_call.1} parent=27 // pred_check_branch
          %150 = sbr.rel (%p148) target = $region32
        $region31: #{tpu_custom_call.1} parent=27 // pred_region
          %151 = dma.done [#allocation10], 1024
        $region32: #{tpu_custom_call.1} parent=27 // pred_fallthru
          _
        // Predicated region
        $region33: #{tpu_custom_call.1} parent=27 // pred_check
          %p152 = pneg %p70
        $region34: #{tpu_custom_call.1} parent=27 // pred_check_branch
          %154 = sbr.rel (%p152) target = $region36
        $region35: #{tpu_custom_call.1} parent=27 // pred_region
          %155 = dma.done [#allocation13], 1024
        $region36: #{tpu_custom_call.1} parent=27 // pred_fallthru
          _
        %p156 = pneg %p49
        %p157 = pneg %p46
        %p158 = pneg %p70
        %p159 = pneg %p67
        %p160 = pneg %p96
        %p161 = pneg %p93
        %s162 = sand.u32 %s83, 1
        %s163 = scalar_lea.sflag [#allocation11], %s162
        %s164 = sand.u32 %s83, 1
        %s165 = smul.addr %s164, 8
        %s166 = scalar_lea.vmem [#allocation14], %s165
        %s167 = smul.u32 %s33, 8
        %s168 = smul.u32 %s33, 32
        loop: start=0, step=1, limit=8
        $region37: #{tpu_custom_call.1} parent=27 // loop_pre_header
          _
        $region38: #{tpu_custom_call.1} parent=27 // loop_header
          %s170 = sphi 0, %s174
          %p171 = scmp.ge.s32.totalorder %s170, 8
        $region39: #{tpu_custom_call.1} parent=27 // loop_header_branch
          %173 = sbr.rel (%p171) target = $region43
        $region40: #{tpu_custom_call.1} parent=27 // loop_body
          %s175 = sadd.s32 %s167, %s170
          %s176 = sld [smem:[#allocation6 + %s175]]
          %s177 = scalar_lea.vmem [#allocation9], %s176
          %v178 = vld [vmem:[%s177] sm:$0x1]
          %s179 = scalar_lea.vmem [#allocation2], %s170
          %180 = vst [vmem:[%s179] sm:$0x1] %v178
          %s181 = sld [smem:[#allocation7 + %s175]]
          %s182 = scalar_lea.vmem [#allocation12], %s181
          %v183 = vld [vmem:[%s182] sm:$0x1]
          %s184 = scalar_lea.vmem [#allocation3], %s170
          %185 = vst [vmem:[%s184] sm:$0x1] %v183
        $region41: #{tpu_custom_call.1} parent=27 // loop_footer
          %s174 = sadd.s32 1, %s170
        $region42: #{tpu_custom_call.1} parent=27 // loop_footer_branch
          %169 = sbr.rel target = $region38
        $region43: #{tpu_custom_call.1} parent=27 // loop_exit
          _
        loop: start=0, step=1, limit=32
        $region44: #{tpu_custom_call.1} parent=27 // loop_pre_header
          _
        $region45: #{tpu_custom_call.1} parent=27 // loop_header
          %s187 = sphi 0, %s191
          %p188 = scmp.ge.s32.totalorder %s187, 32
        $region46: #{tpu_custom_call.1} parent=27 // loop_header_branch
          %190 = sbr.rel (%p188) target = $region50
        $region47: #{tpu_custom_call.1} parent=27 // loop_body
          %s192 = sadd.s32 %s168, %s187
          %s193 = sld [smem:[#allocation8 + %s192]]
          %s194 = scalar_lea.vmem [#allocation12], %s193
          %v195 = vld [vmem:[%s194] sm:$0x1]
          %s196 = scalar_lea.vmem [#allocation4], %s187
          %197 = vst [vmem:[%s196] sm:$0x1] %v195
        $region48: #{tpu_custom_call.1} parent=27 // loop_footer
          %s191 = sadd.s32 1, %s187
        $region49: #{tpu_custom_call.1} parent=27 // loop_footer_branch
          %186 = sbr.rel target = $region45
        $region50: #{tpu_custom_call.1} parent=27 // loop_exit
          _
        %v198 = vld [vmem:[#allocation2] sm:$0xff]
        %v199 = vld [vmem:[#allocation3] sm:$0xff]
        %v200 = vmul.f32 %v198, %v199
        %201 = vadd.xlane.f32.xlu0 %v200
        %v202 = vpop.xlane.xlu0 %201
        %v203 = vmin.f32 %v202, 0.0
        %v204 = vand.u32 2147483647, %v202
        %v205 = vsub.f32 0.0, %v204
        %v206 = vmul.f32 %v205, 1.442695
        %v207 = vpow.pop %v206
        %v208 = vadd.f32 %v207, 1.0
        %v209 = vlog2.pop %v208
        %v210 = vmul.f32 %v209, 0.6931472
        %v211 = vmul.f32 -0.5, %v207
        %v212 = vadd.f32 %v211, 1.0
        %v213 = vmul.f32 %v212, %v207
        %v214 = vand.u32 2147483647, %v207
        %vm215 = vcmp.lt.f32.partialorder %v214, 0.0004427343
        %v216 = vsel %vm215, %v213, %v210
        %v217 = vsub.f32 %v203, %v216
        %vm218 = vcmask 7168
        %v219 = vsel %vm218, %v217, 0.0
        %220 = vadd.xlane.f32.xlu0 %v219
        %v221 = vpop.xlane.xlu0 %220
        %v222 = vrot.slane %v221, 4
        %v223 = vadd.f32 %v221, %v222
        %v224 = vrot.slane %v223, 2
        %v225 = vadd.f32 %v223, %v224
        %v226 = vrot.slane %v225, 1
        %v227 = vadd.f32 %v225, %v226
        %s228 = vtos %v227
        %v229 = vld [vmem:[#allocation4] sm:$0xff]
        %v230 = vmul.f32 %v229, %v198
        %231 = vadd.xlane.f32.xlu0 %v230
        %v232 = vpop.xlane.xlu0 %231
        %v233 = vsub.f32 0.0, %v232
        %v234 = vmin.f32 %v233, 0.0
        %v235 = vand.u32 2147483647, %v233
        %v236 = vsub.f32 0.0, %v235
        %v237 = vmul.f32 %v236, 1.442695
        %v238 = vpow.pop %v237
        %v239 = vadd.f32 %v238, 1.0
        %v240 = vlog2.pop %v239
        %v241 = vmul.f32 %v240, 0.6931472
        %v242 = vmul.f32 -0.5, %v238
        %v243 = vadd.f32 %v242, 1.0
        %v244 = vmul.f32 %v243, %v238
        %v245 = vand.u32 2147483647, %v238
        %vm246 = vcmp.lt.f32.partialorder %v245, 0.0004427343
        %v247 = vsel %vm246, %v244, %v241
        %v248 = vsub.f32 %v234, %v247
        %v249 = vsel %vm218, %v248, 0.0
        %250 = vadd.xlane.f32.xlu0 %v249
        %v251 = vpop.xlane.xlu0 %250
        %v252 = vrot.slane %v251, 4
        %v253 = vadd.f32 %v251, %v252
        %v254 = vrot.slane %v253, 2
        %v255 = vadd.f32 %v253, %v254
        %v256 = vrot.slane %v255, 1
        %v257 = vadd.f32 %v255, %v256
        %s258 = vtos %v257
        %s259 = sadd.f32 %s228, %s258
        %v260 = vld [vmem:[#allocation4 + $0x8] sm:$0xff]
        %v261 = vmul.f32 %v260, %v198
        %262 = vadd.xlane.f32.xlu0 %v261
        %v263 = vpop.xlane.xlu0 %262
        %v264 = vsub.f32 0.0, %v263
        %v265 = vmin.f32 %v264, 0.0
        %v266 = vand.u32 2147483647, %v264
        %v267 = vsub.f32 0.0, %v266
        %v268 = vmul.f32 %v267, 1.442695
        %v269 = vpow.pop %v268
        %v270 = vadd.f32 %v269, 1.0
        %v271 = vlog2.pop %v270
        %v272 = vmul.f32 %v271, 0.6931472
        %v273 = vmul.f32 -0.5, %v269
        %v274 = vadd.f32 %v273, 1.0
        %v275 = vmul.f32 %v274, %v269
        %v276 = vand.u32 2147483647, %v269
        %vm277 = vcmp.lt.f32.partialorder %v276, 0.0004427343
        %v278 = vsel %vm277, %v275, %v272
        %v279 = vsub.f32 %v265, %v278
        %v280 = vsel %vm218, %v279, 0.0
        %281 = vadd.xlane.f32.xlu0 %v280
        %v282 = vpop.xlane.xlu0 %281
        %v283 = vrot.slane %v282, 4
        %v284 = vadd.f32 %v282, %v283
        %v285 = vrot.slane %v284, 2
        %v286 = vadd.f32 %v284, %v285
        %v287 = vrot.slane %v286, 1
        %v288 = vadd.f32 %v286, %v287
        %s289 = vtos %v288
        %s290 = sadd.f32 %s259, %s289
        %v291 = vld [vmem:[#allocation4 + $0x10] sm:$0xff]
        %v292 = vmul.f32 %v291, %v198
        %293 = vadd.xlane.f32.xlu0 %v292
        %v294 = vpop.xlane.xlu0 %293
        %v295 = vsub.f32 0.0, %v294
        %v296 = vmin.f32 %v295, 0.0
        %v297 = vand.u32 2147483647, %v295
        %v298 = vsub.f32 0.0, %v297
        %v299 = vmul.f32 %v298, 1.442695
        %v300 = vpow.pop %v299
        %v301 = vadd.f32 %v300, 1.0
        %v302 = vlog2.pop %v301
        %v303 = vmul.f32 %v302, 0.6931472
        %v304 = vmul.f32 -0.5, %v300
        %v305 = vadd.f32 %v304, 1.0
        %v306 = vmul.f32 %v305, %v300
        %v307 = vand.u32 2147483647, %v300
        %vm308 = vcmp.lt.f32.partialorder %v307, 0.0004427343
        %v309 = vsel %vm308, %v306, %v303
        %v310 = vsub.f32 %v296, %v309
        %v311 = vsel %vm218, %v310, 0.0
        %312 = vadd.xlane.f32.xlu0 %v311
        %v313 = vpop.xlane.xlu0 %312
        %v314 = vrot.slane %v313, 4
        %v315 = vadd.f32 %v313, %v314
        %v316 = vrot.slane %v315, 2
        %v317 = vadd.f32 %v315, %v316
        %v318 = vrot.slane %v317, 1
        %v319 = vadd.f32 %v317, %v318
        %s320 = vtos %v319
        %s321 = sadd.f32 %s290, %s320
        %v322 = vld [vmem:[#allocation4 + $0x18] sm:$0xff]
        %v323 = vmul.f32 %v322, %v198
        %324 = vadd.xlane.f32.xlu0 %v323
        %v325 = vpop.xlane.xlu0 %324
        %v326 = vsub.f32 0.0, %v325
        %v327 = vmin.f32 %v326, 0.0
        %v328 = vand.u32 2147483647, %v326
        %v329 = vsub.f32 0.0, %v328
        %v330 = vmul.f32 %v329, 1.442695
        %v331 = vpow.pop %v330
        %v332 = vadd.f32 %v331, 1.0
        %v333 = vlog2.pop %v332
        %v334 = vmul.f32 %v333, 0.6931472
        %v335 = vmul.f32 -0.5, %v331
        %v336 = vadd.f32 %v335, 1.0
        %v337 = vmul.f32 %v336, %v331
        %v338 = vand.u32 2147483647, %v331
        %vm339 = vcmp.lt.f32.partialorder %v338, 0.0004427343
        %v340 = vsel %vm339, %v337, %v334
        %v341 = vsub.f32 %v327, %v340
        %v342 = vsel %vm218, %v341, 0.0
        %343 = vadd.xlane.f32.xlu0 %v342
        %v344 = vpop.xlane.xlu0 %343
        %v345 = vrot.slane %v344, 4
        %v346 = vadd.f32 %v344, %v345
        %v347 = vrot.slane %v346, 2
        %v348 = vadd.f32 %v346, %v347
        %v349 = vrot.slane %v348, 1
        %v350 = vadd.f32 %v348, %v349
        %s351 = vtos %v350
        %s352 = sadd.f32 %s321, %s351
        %v353 = vstv %s352
        %354 = vst [vmem:[%s166] sm:$0xff] %v353
        %s355 = sand.u32 %s83, 1
        %s356 = scalar_lea.sflag [#allocation11], %s355
        %s357 = sand.u32 %s83, 1
        %s358 = smul.addr %s357, 8
        %s359 = scalar_lea.vmem [#allocation14], %s358
        // Predicated region
        $region51: #{tpu_custom_call.1} parent=27 // pred_check
          %p360 = pneg %p93
        $region52: #{tpu_custom_call.1} parent=27 // pred_check_branch
          %362 = sbr.rel (%p360) target = $region54
        $region53: #{tpu_custom_call.1} parent=27 // pred_region
          %s364 = ssub.s32 128, 128
          %365 = vsyncadd %s356, %s364
          %s366 = smul.addr %s33, 128
          %s367 = scalar_lea.hbm %s5, %s366
          %s369 = sshll.u32 %s359, 4
          %s370 = int_to_ptr.vmem [resolvable:$true] %s369
          %372 = dma.vmem_to_hbm [thread:$0]  %s370, 128, %s367, %s356
        $region54: #{tpu_custom_call.1} parent=27 // pred_fallthru
          _
      $region28: #{tpu_custom_call.1} parent=5 // pred_fallthru
        _
      %p373 = scmp.le.s32.totalorder 2, %s28
      // Predicated region
      $region55: #{tpu_custom_call.1} parent=5 // pred_check
        %p374 = pneg %p373
      $region56: #{tpu_custom_call.1} parent=5 // pred_check_branch
        %376 = sbr.rel (%p374) target = $region58
      $region57: #{tpu_custom_call.1} parent=5 // pred_region
        %s377 = ssub.s32 %s28, 2
        // Predicated region
        $region59: #{tpu_custom_call.1} parent=57 // pred_check
          %p378 = pneg %p99
        $region60: #{tpu_custom_call.1} parent=57 // pred_check_branch
          %380 = sbr.rel (%p378) target = $region62
        $region61: #{tpu_custom_call.1} parent=57 // pred_region
          %s381 = sand.u32 %s84, 1
          %s382 = scalar_lea.sflag [#allocation11], %s381
          %s383 = sand.u32 %s84, 1
          %s384 = smul.addr %s383, 8
          %s385 = scalar_lea.vmem [#allocation14], %s384
          %386 = dma.done %s382, 128
        $region62: #{tpu_custom_call.1} parent=57 // pred_fallthru
          _
      $region58: #{tpu_custom_call.1} parent=5 // pred_fallthru
        _
    $region6: #{tpu_custom_call.1} parent=1 // loop_footer
      %s32 = sadd.s32 1, %s28
    $region7: #{tpu_custom_call.1} parent=1 // loop_footer_branch
      %27 = sbr.rel target = $region3
    $region8: #{tpu_custom_call.1} parent=1 // loop_exit
      _
    %387 = vsyncpa [#allocation10], 1
    %s388 = scalar_lea.sflag [#allocation10], 1
    %389 = vsyncpa %s388, 1
    %390 = vsyncpa [#allocation13], 1
    %391 = vsyncpa [#allocation11], 1
    %s392 = scalar_lea.sflag [#allocation11], 1
    %393 = vsyncpa %s392, 1

</llo_original>
